<compile_context>
chip_gen: v7x
topology: tpu7x:2x2x1
jax: 0.10.0
libtpu: 0.0.40
codegen_flags: <defaults>
</compile_context>

<pallas_src>
import functools

import jax
import jax.numpy as jnp
from jax import lax
from jax.experimental import pallas as pl
from jax.experimental.pallas import tpu as pltpu


def _round_up(x: int, m: int) -> int:
    return (x + m - 1) // m * m


def _choose_tiles(n: int, tn_target: int) -> tuple[int, int]:
    # Cap tn at 4096: triple-buffered bf16 weight tiles stay well inside
    # v7x's 64 MiB physical VMEM and (with an explicit vmem limit when needed)
    # v5e's scoped budget, while keeping per-grid-step overhead small.
    tn_target = max(128, min(int(tn_target), 4096))
    n_pad = _round_up(max(n, 1), 128)
    tn = min(n_pad, _round_up(tn_target, 128))
    n_pad = _round_up(n_pad, tn)
    return n_pad, tn


def _fc_head_kernel(x_ref, w_ref, b_ref, o_ref):
    # x_ref: (Bp, D)  bf16  — resident activation (full K; no K grid axis)
    # w_ref: (tn, D)  bf16  — streamed weight tile, native [N, D] layout
    # b_ref: (1, tn)  f32   — bias slab for this N block
    # o_ref: (Bp, tn) f32   — lane-dense output tile
    acc = lax.dot_general(
        x_ref[...], w_ref[...],
        dimension_numbers=(((1,), (1,)), ((), ())),   # trans_b contraction on the MXU
        preferred_element_type=jnp.float32,
    )
    o_ref[...] = acc + b_ref[...]


def prepare_fc_head(fc_weight, fc_bias, *, tn_target: int = 2048):
    """One-time preparation of the frozen fc head.

    Only a bf16 cast and an N-pad — no transpose (the kernel consumes W in its
    native PyTorch [N, D] layout).  Call once at init; the per-forward path
    never touches the vocab-sized weight on the host side again.

    fc_weight: [N, D] f32 (PyTorch nn.Linear convention)
    fc_bias:   [N]    f32
    returns:   (w_padded [Np, D] bf16, b_padded [1, Np] f32, N, tn)
    """
    n, d = fc_weight.shape
    n_pad, tn = _choose_tiles(n, tn_target)
    w_p = jnp.zeros((n_pad, d), jnp.bfloat16).at[:n, :].set(fc_weight.astype(jnp.bfloat16))
    b_p = jnp.zeros((1, n_pad), jnp.float32).at[0, :n].set(fc_bias.astype(jnp.float32))
    return w_p, b_p, n, tn


@functools.partial(jax.jit, static_argnames=("n_out", "tn", "use_core_parallel"))
def base_lm_head(last_hidden_state, w_p, b_p, *, n_out: int, tn: int,
                 use_core_parallel: bool = False):
    """logits = fc(last_hidden_state[:, 0, :]) — the compute of BaseLM.forward.

    last_hidden_state: [B, S, D] f32
    w_p, b_p:          outputs of prepare_fc_head (already bf16 / padded)
    returns:           [B, n_out] f32
    """
    B, S, D = last_hidden_state.shape
    Np, D_w = w_p.shape
    assert D_w == D, "fc in_features must equal hidden size D"
    assert Np % tn == 0
    num_tiles = Np // tn

    # First-token slice BEFORE the kernel — never DMA the other S-1 tokens.
    x0 = last_hidden_state[:, 0, :].astype(jnp.bfloat16)

    # Batch padded to the bf16 sublane multiple; K left fully resident (the
    # binding resource is the weight DMA stream, not MXU row utilization).
    Bp = _round_up(max(B, 1), 16)
    x_p = jnp.zeros((Bp, D), jnp.bfloat16).at[:B, :].set(x0)

    # Streamed weight: triple-buffer when there are enough tiles to hide the
    # per-step scalar prologue / DMA-issue latency behind an in-flight copy.
    nbuf = 3 if num_tiles >= 3 else 2
    if nbuf == 3:
        w_spec = pl.BlockSpec((tn, D), lambda j: (j, 0), pipeline_mode=pl.Buffered(3))
    else:
        w_spec = pl.BlockSpec((tn, D), lambda j: (j, 0))

    # VMEM estimate (bytes): weight buffers + double-buffered out/bias + x.
    vmem_est = nbuf * tn * D * 2 + 2 * Bp * tn * 4 + 2 * tn * 4 + 2 * Bp * D * 2
    vmem_limit = None
    if vmem_est > (14 << 20):          # might exceed v5e's ~16 MiB scoped default
        vmem_limit = int(min(2 * vmem_est, 56 << 20))   # below v7x's 64 MiB physical

    # "parallel" is near-neutral for TC sharding; CORE_PARALLEL (opt-in) lets
    # v7x's two TensorCores each stream half of the N tiles.
    sem = (pltpu.CORE_PARALLEL,) if use_core_parallel else (pltpu.PARALLEL,)
    cp_kwargs = dict(dimension_semantics=sem)
    if vmem_limit is not None:
        cp_kwargs["vmem_limit_bytes"] = vmem_limit

    cost = pl.CostEstimate(
        flops=2 * Bp * D * Np,
        transcendentals=0,
        bytes_accessed=Bp * D * 2 + Np * D * 2 + Np * 4 + Bp * Np * 4,
    )

    out = pl.pallas_call(
        _fc_head_kernel,
        out_shape=jax.ShapeDtypeStruct((Bp, Np), jnp.float32),
        grid_spec=pltpu.PrefetchScalarGridSpec(
            num_scalar_prefetch=0,
            grid=(num_tiles,),
            in_specs=[
                pl.BlockSpec((Bp, D), lambda j: (0, 0)),   # activation: resident
                w_spec,                                    # weight: stream over N
                pl.BlockSpec((1, tn), lambda j: (0, j)),   # bias slab per N tile
            ],
            out_specs=pl.BlockSpec((Bp, tn), lambda j: (0, j)),
        ),
        compiler_params=pltpu.CompilerParams(**cp_kwargs),
        cost_estimate=cost,
    )(x_p, w_p, b_p)

    # Strip batch / vocab padding.
    return out[:B, :n_out]


if __name__ == "__main__":
    key = jax.random.PRNGKey(0)

    # Small stand-in shapes consistent with the module:
    #   batch=2, seq=8, hidden=256, fc output width 320 (tiny stand-in for the
    #   real GPT-2 D=768 / vocab=50257; the wrapper handles any sizes).
    B, S, D = 2, 8, 256
    N = 320

    k1, k2 = jax.random.split(key, 2)
    # TODO(synk): output of the frozen pretrained GPT-2 backbone is modeled as
    #             a random activation tensor (no in-script equivalent).
    last_hidden_state = jax.random.normal(k1, (B, S, D), jnp.float32)

    # BaseLM.init_weights(): xavier_uniform_ weight, zero bias.
    limit = (6.0 / (D + N)) ** 0.5
    fc_w = jax.random.uniform(k2, (N, D), jnp.float32, minval=-limit, maxval=limit)
    fc_b = jnp.zeros((N,), jnp.float32)

    # Reference using the same bf16-input / f32-accumulate math as the kernel.
    x0 = last_hidden_state[:, 0, :].astype(jnp.bfloat16).astype(jnp.float32)
    w_ref = fc_w.astype(jnp.bfloat16).astype(jnp.float32)
    ref = x0 @ w_ref.T + fc_b

    # (a) default tile — single N tile at these sizes.
    w_p, b_p, n_out, tn = prepare_fc_head(fc_w, fc_b)
    logits = jax.block_until_ready(
        base_lm_head(last_hidden_state, w_p, b_p, n_out=n_out, tn=tn))
    assert logits.shape == (B, N)
    err_a = float(jnp.max(jnp.abs(logits - ref)))
    assert err_a < 1e-3, f"max abs err (default tile) {err_a}"

    # (b) small tile — exercises the multi-tile, triple-buffered weight path.
    w_p2, b_p2, n_out2, tn2 = prepare_fc_head(fc_w, fc_b, tn_target=128)
    logits2 = jax.block_until_ready(
        base_lm_head(last_hidden_state, w_p2, b_p2, n_out=n_out2, tn=tn2))
    assert logits2.shape == (B, N)
    err_b = float(jnp.max(jnp.abs(logits2 - ref)))
    assert err_b < 1e-3, f"max abs err (tn=128) {err_b}"

    print("KERNEL_OK")
</pallas_src>

<mosaic_0001>
module attributes {stable_mosaic.version = 11 : i64} {
  func.func @_fc_head_kernel(%arg0: i32, %arg1: memref<16x256xbf16, #tpu.memory_space<vmem>>, %arg2: memref<384x256xbf16, #tpu.memory_space<vmem>>, %arg3: memref<1x384xf32, #tpu.memory_space<vmem>>, %arg4: memref<16x384xf32, #tpu.memory_space<vmem>>) attributes {dimension_semantics = [#tpu.dimension_semantics<parallel>], iteration_bounds = array<i64: 1>, scalar_prefetch = 0 : i64, scratch_operands = 0 : i64, tpu.core_type = #tpu.core_type<tc>, window_params = [{pipeline_mode = #tpu.pipeline_mode<synchronous>, transform_indices = @transform_0, window_bounds = array<i64: 16, 256>}, {transform_indices = @transform_1, window_bounds = array<i64: 384, 256>}, {transform_indices = @transform_2, window_bounds = array<i64: 1, 384>}, {transform_indices = @transform_3, window_bounds = array<i64: 16, 384>}]} {
    %c0 = arith.constant 0 : index
    %c0_0 = arith.constant 0 : index
    %0 = vector.load %arg1[%c0, %c0_0] : memref<16x256xbf16, #tpu.memory_space<vmem>>, vector<16x256xbf16>
    %c0_1 = arith.constant 0 : index
    %c0_2 = arith.constant 0 : index
    %1 = vector.load %arg2[%c0_1, %c0_2] : memref<384x256xbf16, #tpu.memory_space<vmem>>, vector<384x256xbf16>
    %cst = arith.constant dense<0.000000e+00> : vector<16x384xf32>
    %2 = tpu.matmul %0, %1, %cst {dimension_numbers = #tpu.dot_dimension_numbers<[1], [1], [0], [0], [0, 0, 1, 0], [], []>} : vector<16x256xbf16>, vector<384x256xbf16>, vector<16x384xf32> -> vector<16x384xf32>
    %c0_3 = arith.constant 0 : index
    %c0_4 = arith.constant 0 : index
    %3 = vector.load %arg3[%c0_3, %c0_4] : memref<1x384xf32, #tpu.memory_space<vmem>>, vector<1x384xf32>
    %4 = vector.broadcast %3 : vector<1x384xf32> to vector<16x384xf32>
    %5 = arith.addf %2, %4 : vector<16x384xf32>
    %c0_5 = arith.constant 0 : index
    %c0_6 = arith.constant 0 : index
    %6 = vector.load %arg4[%c0_5, %c0_6] : memref<16x384xf32, #tpu.memory_space<vmem>>, vector<16x384xf32>
    tpu.vector_store %arg4[%c0_5, %c0_6], %5 {strides = array<i32>} : memref<16x384xf32, #tpu.memory_space<vmem>>, vector<16x384xf32>,
    return
  }
  func.func @transform_0(%arg0: i32) -> (i32, i32) {
    %c0_i32 = arith.constant 0 : i32
    %c0_i32_0 = arith.constant 0 : i32
    %c0_i32_1 = arith.constant 0 : i32
    return %c0_i32, %c0_i32_0 : i32, i32
  }
  func.func @transform_1(%arg0: i32) -> (i32, i32) {
    %c0_i32 = arith.constant 0 : i32
    %c0_i32_0 = arith.constant 0 : i32
    return %arg0, %c0_i32 : i32, i32
  }
  func.func @transform_2(%arg0: i32) -> (i32, i32) {
    %c0_i32 = arith.constant 0 : i32
    %c0_i32_0 = arith.constant 0 : i32
    return %c0_i32, %arg0 : i32, i32
  }
  func.func @transform_3(%arg0: i32) -> (i32, i32) {
    %c0_i32 = arith.constant 0 : i32
    %c0_i32_0 = arith.constant 0 : i32
    return %c0_i32, %arg0 : i32, i32
  }
}

</mosaic_0001>

<llo_original>
// kernel: base_lm_head.1
$region0: #{base_lm_head.1}
  #allocation0 [shape = 'u32[]', space=smem, size = 0x4, offset = 0x4, fixed_abs, tag = 'smem constant byte address 0x4 - core index']
  #allocation1 [shape = 'u32[144,128]{1,0:T(1,128)}', space=vmem, size = 0x12000, scoped, tag = 'internal scratch']
  %s0 = inlined_call_operand.vmem [shape: bf16[16,256], index: 0, kind: input, shape index: {}]
  %s1 = inlined_call_operand.hbm [shape: bf16[384,256], index: 1, kind: input, shape index: {}]
  %s2 = inlined_call_operand.vmem [shape: f32[1,384], index: 2, kind: input, shape index: {}]
  %s3 = inlined_call_operand.vmem [shape: f32[16,384], index: 3, kind: output, shape index: {}]
  %s4 = sld [smem:[#allocation0]]
  $region26: #{base_lm_head.1} parent=0
    _
  %s6 = ssub.s32 1, %s4
  %s7 = scalar_select 0, %s6, %s4
  $region1: #{base_lm_head.1} parent=0
    #allocation2 [shape = 'u8[196608]{0}', space=vmem, size = 0x30000, scoped, tag = 'input window, operand 1, single buffered']
    #allocation3 [shape = 's32[1]{0}', space=sflag, size = 0x4, scoped, tag = 'scoped memory for base_lm_head.1']
    %8 = vsyncpa [#allocation3], 0
    // Predicated region
    $region2: #{base_lm_head.1} parent=1 // pred_check
      _
    $region3: #{base_lm_head.1} parent=1 // pred_check_branch
      %10 = sbr.rel (0) target = $region5
    $region4: #{base_lm_head.1} parent=1 // pred_region
      _
    $region5: #{base_lm_head.1} parent=1 // pred_fallthru
      _
    // Predicated region
    $region6: #{base_lm_head.1} parent=1 // pred_check
      _
    $region7: #{base_lm_head.1} parent=1 // pred_check_branch
      %12 = sbr.rel (0) target = $region9
    $region8: #{base_lm_head.1} parent=1 // pred_region
      %s14 = ssub.s32 6144, 6144
      %15 = vsyncadd [#allocation3], %s14
      %s16 = sshll.u32 [#allocation2], 4
      %s17 = int_to_ptr.vmem [resolvable:$true] %s16
      %22 = dma.hbm_to_vmem [thread:$0]  %s1, 6144, %s17, [#allocation3], 128, 128, 8
    $region9: #{base_lm_head.1} parent=1 // pred_fallthru
      _
    // Predicated region
    $region10: #{base_lm_head.1} parent=1 // pred_check
      _
    $region11: #{base_lm_head.1} parent=1 // pred_check_branch
      %24 = sbr.rel (0) target = $region13
    $region12: #{base_lm_head.1} parent=1 // pred_region
      _
    $region13: #{base_lm_head.1} parent=1 // pred_fallthru
      _
    // Predicated region
    $region14: #{base_lm_head.1} parent=1 // pred_check
      _
    $region15: #{base_lm_head.1} parent=1 // pred_check_branch
      %26 = sbr.rel (0) target = $region17
    $region16: #{base_lm_head.1} parent=1 // pred_region
      %27 = dma.done [#allocation3], 6144
    $region17: #{base_lm_head.1} parent=1 // pred_fallthru
      _
    %v29 = vld [vmem:[%s0] sm:$0xff]
    %v30 = vld [vmem:[%s0 + $0x8] sm:$0xff]
    %v31 = vld [vmem:[#allocation2] sm:$0xff]
    %v32 = vld [vmem:[#allocation2 + $0x8] sm:$0xff]
    %v33 = vld [vmem:[#allocation2 + $0x10] sm:$0xff]
    %v34 = vld [vmem:[#allocation2 + $0x18] sm:$0xff]
    %v35 = vld [vmem:[#allocation2 + $0x20] sm:$0xff]
    %v36 = vld [vmem:[#allocation2 + $0x28] sm:$0xff]
    %v37 = vld [vmem:[#allocation2 + $0x30] sm:$0xff]
    %v38 = vld [vmem:[#allocation2 + $0x38] sm:$0xff]
    %v39 = vld [vmem:[#allocation2 + $0x40] sm:$0xff]
    %v40 = vld [vmem:[#allocation2 + $0x48] sm:$0xff]
    %v41 = vld [vmem:[#allocation2 + $0x50] sm:$0xff]
    %v42 = vld [vmem:[#allocation2 + $0x58] sm:$0xff]
    %v43 = vld [vmem:[#allocation2 + $0x60] sm:$0xff]
    %v44 = vld [vmem:[#allocation2 + $0x68] sm:$0xff]
    %v45 = vld [vmem:[#allocation2 + $0x70] sm:$0xff]
    %v46 = vld [vmem:[#allocation2 + $0x78] sm:$0xff]
    %v47 = vld [vmem:[#allocation2 + $0x80] sm:$0xff]
    %v48 = vld [vmem:[#allocation2 + $0x88] sm:$0xff]
    %v49 = vld [vmem:[#allocation2 + $0x90] sm:$0xff]
    %v50 = vld [vmem:[#allocation2 + $0x98] sm:$0xff]
    %v51 = vld [vmem:[#allocation2 + $0xa0] sm:$0xff]
    %v52 = vld [vmem:[#allocation2 + $0xa8] sm:$0xff]
    %v53 = vld [vmem:[#allocation2 + $0xb0] sm:$0xff]
    %v54 = vld [vmem:[#allocation2 + $0xb8] sm:$0xff]
    %v55 = vld [vmem:[#allocation2 + $0xc0] sm:$0xff]
    %v56 = vld [vmem:[#allocation2 + $0xc8] sm:$0xff]
    %v57 = vld [vmem:[#allocation2 + $0xd0] sm:$0xff]
    %v58 = vld [vmem:[#allocation2 + $0xd8] sm:$0xff]
    %v59 = vld [vmem:[#allocation2 + $0xe0] sm:$0xff]
    %v60 = vld [vmem:[#allocation2 + $0xe8] sm:$0xff]
    %v61 = vld [vmem:[#allocation2 + $0xf0] sm:$0xff]
    %v62 = vld [vmem:[#allocation2 + $0xf8] sm:$0xff]
    %v63 = vld [vmem:[#allocation2 + $0x100] sm:$0xff]
    %v64 = vld [vmem:[#allocation2 + $0x108] sm:$0xff]
    %v65 = vld [vmem:[#allocation2 + $0x110] sm:$0xff]
    %v66 = vld [vmem:[#allocation2 + $0x118] sm:$0xff]
    %v67 = vld [vmem:[#allocation2 + $0x120] sm:$0xff]
    %v68 = vld [vmem:[#allocation2 + $0x128] sm:$0xff]
    %v69 = vld [vmem:[#allocation2 + $0x130] sm:$0xff]
    %v70 = vld [vmem:[#allocation2 + $0x138] sm:$0xff]
    %v71 = vld [vmem:[#allocation2 + $0x140] sm:$0xff]
    %v72 = vld [vmem:[#allocation2 + $0x148] sm:$0xff]
    %v73 = vld [vmem:[#allocation2 + $0x150] sm:$0xff]
    %v74 = vld [vmem:[#allocation2 + $0x158] sm:$0xff]
    %v75 = vld [vmem:[#allocation2 + $0x160] sm:$0xff]
    %v76 = vld [vmem:[#allocation2 + $0x168] sm:$0xff]
    %v77 = vld [vmem:[#allocation2 + $0x170] sm:$0xff]
    %v78 = vld [vmem:[#allocation2 + $0x178] sm:$0xff]
    %v79 = vld [vmem:[%s2] sm:$0x7]
    %v81 = vlaneseq
    %v82 = vshrl.u32 %v81, 7
    %v83 = vsub.s32 0, %v82
    %v84 = vrot.slane %v79, %v83
    %v85 = vlaneseq
    %v86 = vshrl.u32 %v85, 7
    %v87 = vsub.s32 1, %v86
    %v88 = vrot.slane %v79, %v87
    %v89 = vlaneseq
    %v90 = vshrl.u32 %v89, 7
    %v91 = vsub.s32 2, %v90
    %v92 = vrot.slane %v79, %v91
    %v98 = vunpack.c.l.b16 %v29
    %v99 = vunpack.c.h.b16 %v29
    %v100 = vunpack.c.l.b16 %v30
    %v101 = vunpack.c.h.b16 %v30
    %v102 = vpack.c.b16 %v100, %v98
    %v103 = vpack.c.b16 %v101, %v99
    %v154 = vunpack.c.l.b16 %v31
    %v155 = vunpack.c.h.b16 %v31
    %v156 = vunpack.c.l.b16 %v32
    %v157 = vunpack.c.h.b16 %v32
    %v158 = vunpack.c.l.b16 %v33
    %v159 = vunpack.c.h.b16 %v33
    %v160 = vunpack.c.l.b16 %v34
    %v161 = vunpack.c.h.b16 %v34
    %v162 = vunpack.c.l.b16 %v35
    %v163 = vunpack.c.h.b16 %v35
    %v164 = vunpack.c.l.b16 %v36
    %v165 = vunpack.c.h.b16 %v36
    %v166 = vunpack.c.l.b16 %v37
    %v167 = vunpack.c.h.b16 %v37
    %v168 = vunpack.c.l.b16 %v38
    %v169 = vunpack.c.h.b16 %v38
    %v170 = vunpack.c.l.b16 %v39
    %v171 = vunpack.c.h.b16 %v39
    %v172 = vunpack.c.l.b16 %v40
    %v173 = vunpack.c.h.b16 %v40
    %v174 = vunpack.c.l.b16 %v41
    %v175 = vunpack.c.h.b16 %v41
    %v176 = vunpack.c.l.b16 %v42
    %v177 = vunpack.c.h.b16 %v42
    %v178 = vunpack.c.l.b16 %v43
    %v179 = vunpack.c.h.b16 %v43
    %v180 = vunpack.c.l.b16 %v44
    %v181 = vunpack.c.h.b16 %v44
    %v182 = vunpack.c.l.b16 %v45
    %v183 = vunpack.c.h.b16 %v45
    %v184 = vunpack.c.l.b16 %v46
    %v185 = vunpack.c.h.b16 %v46
    %v186 = vunpack.c.l.b16 %v47
    %v187 = vunpack.c.h.b16 %v47
    %v188 = vunpack.c.l.b16 %v48
    %v189 = vunpack.c.h.b16 %v48
    %v190 = vunpack.c.l.b16 %v49
    %v191 = vunpack.c.h.b16 %v49
    %v192 = vunpack.c.l.b16 %v50
    %v193 = vunpack.c.h.b16 %v50
    %v194 = vunpack.c.l.b16 %v51
    %v195 = vunpack.c.h.b16 %v51
    %v196 = vunpack.c.l.b16 %v52
    %v197 = vunpack.c.h.b16 %v52
    %v198 = vunpack.c.l.b16 %v53
    %v199 = vunpack.c.h.b16 %v53
    %v200 = vunpack.c.l.b16 %v54
    %v201 = vunpack.c.h.b16 %v54
    %v202 = vunpack.c.l.b16 %v55
    %v203 = vunpack.c.h.b16 %v55
    %v204 = vunpack.c.l.b16 %v56
    %v205 = vunpack.c.h.b16 %v56
    %v206 = vunpack.c.l.b16 %v57
    %v207 = vunpack.c.h.b16 %v57
    %v208 = vunpack.c.l.b16 %v58
    %v209 = vunpack.c.h.b16 %v58
    %v210 = vunpack.c.l.b16 %v59
    %v211 = vunpack.c.h.b16 %v59
    %v212 = vunpack.c.l.b16 %v60
    %v213 = vunpack.c.h.b16 %v60
    %v214 = vunpack.c.l.b16 %v61
    %v215 = vunpack.c.h.b16 %v61
    %v216 = vunpack.c.l.b16 %v62
    %v217 = vunpack.c.h.b16 %v62
    %v218 = vunpack.c.l.b16 %v63
    %v219 = vunpack.c.h.b16 %v63
    %v220 = vunpack.c.l.b16 %v64
    %v221 = vunpack.c.h.b16 %v64
    %v222 = vunpack.c.l.b16 %v65
    %v223 = vunpack.c.h.b16 %v65
    %v224 = vunpack.c.l.b16 %v66
    %v225 = vunpack.c.h.b16 %v66
    %v226 = vunpack.c.l.b16 %v67
    %v227 = vunpack.c.h.b16 %v67
    %v228 = vunpack.c.l.b16 %v68
    %v229 = vunpack.c.h.b16 %v68
    %v230 = vunpack.c.l.b16 %v69
    %v231 = vunpack.c.h.b16 %v69
    %v232 = vunpack.c.l.b16 %v70
    %v233 = vunpack.c.h.b16 %v70
    %v234 = vunpack.c.l.b16 %v71
    %v235 = vunpack.c.h.b16 %v71
    %v236 = vunpack.c.l.b16 %v72
    %v237 = vunpack.c.h.b16 %v72
    %v238 = vunpack.c.l.b16 %v73
    %v239 = vunpack.c.h.b16 %v73
    %v240 = vunpack.c.l.b16 %v74
    %v241 = vunpack.c.h.b16 %v74
    %v242 = vunpack.c.l.b16 %v75
    %v243 = vunpack.c.h.b16 %v75
    %v244 = vunpack.c.l.b16 %v76
    %v245 = vunpack.c.h.b16 %v76
    %v246 = vunpack.c.l.b16 %v77
    %v247 = vunpack.c.h.b16 %v77
    %v248 = vunpack.c.l.b16 %v78
    %v249 = vunpack.c.h.b16 %v78
    %v250 = vpack.c.b16 %v156, %v154
    %v251 = vpack.c.b16 %v157, %v155
    %v252 = vpack.c.b16 %v160, %v158
    %v253 = vpack.c.b16 %v161, %v159
    %v254 = vpack.c.b16 %v164, %v162
    %v255 = vpack.c.b16 %v165, %v163
    %v256 = vpack.c.b16 %v168, %v166
    %v257 = vpack.c.b16 %v169, %v167
    %v258 = vpack.c.b16 %v172, %v170
    %v259 = vpack.c.b16 %v173, %v171
    %v260 = vpack.c.b16 %v176, %v174
    %v261 = vpack.c.b16 %v177, %v175
    %v262 = vpack.c.b16 %v180, %v178
    %v263 = vpack.c.b16 %v181, %v179
    %v264 = vpack.c.b16 %v184, %v182
    %v265 = vpack.c.b16 %v185, %v183
    %v266 = vpack.c.b16 %v188, %v186
    %v267 = vpack.c.b16 %v189, %v187
    %v268 = vpack.c.b16 %v192, %v190
    %v269 = vpack.c.b16 %v193, %v191
    %v270 = vpack.c.b16 %v196, %v194
    %v271 = vpack.c.b16 %v197, %v195
    %v272 = vpack.c.b16 %v200, %v198
    %v273 = vpack.c.b16 %v201, %v199
    %v274 = vpack.c.b16 %v204, %v202
    %v275 = vpack.c.b16 %v205, %v203
    %v276 = vpack.c.b16 %v208, %v206
    %v277 = vpack.c.b16 %v209, %v207
    %v278 = vpack.c.b16 %v212, %v210
    %v279 = vpack.c.b16 %v213, %v211
    %v280 = vpack.c.b16 %v216, %v214
    %v281 = vpack.c.b16 %v217, %v215
    %v282 = vpack.c.b16 %v220, %v218
    %v283 = vpack.c.b16 %v221, %v219
    %v284 = vpack.c.b16 %v224, %v222
    %v285 = vpack.c.b16 %v225, %v223
    %v286 = vpack.c.b16 %v228, %v226
    %v287 = vpack.c.b16 %v229, %v227
    %v288 = vpack.c.b16 %v232, %v230
    %v289 = vpack.c.b16 %v233, %v231
    %v290 = vpack.c.b16 %v236, %v234
    %v291 = vpack.c.b16 %v237, %v235
    %v292 = vpack.c.b16 %v240, %v238
    %v293 = vpack.c.b16 %v241, %v239
    %v294 = vpack.c.b16 %v244, %v242
    %v295 = vpack.c.b16 %v245, %v243
    %v296 = vpack.c.b16 %v248, %v246
    %v297 = vpack.c.b16 %v249, %v247
    %346 = vmatprep.subr.bf16.mxu0 %v251
    %347 = vmatpush1.bf16.xpose.msra.mxu0 %v250
    %348 = vmatprep.subr.bf16.mxu0 %v253
    %349 = vmatpush1.bf16.xpose.msra.mxu0 %v252
    %350 = vmatprep.subr.bf16.mxu0 %v255
    %351 = vmatpush1.bf16.xpose.msra.mxu0 %v254
    %352 = vmatprep.subr.bf16.mxu0 %v257
    %353 = vmatpush1.bf16.xpose.msra.mxu0 %v256
    %354 = vmatprep.subr.bf16.mxu0 %v259
    %355 = vmatpush1.bf16.xpose.msra.mxu0 %v258
    %356 = vmatprep.subr.bf16.mxu0 %v261
    %357 = vmatpush1.bf16.xpose.msra.mxu0 %v260
    %358 = vmatprep.subr.bf16.mxu0 %v263
    %359 = vmatpush1.bf16.xpose.msra.mxu0 %v262
    %360 = vmatprep.subr.bf16.mxu0 %v265
    %361 = vmatpush1.bf16.xpose.msra.mxu0 %v264
    %362 = vmatprep.subr.bf16.mxu0 %v267
    %363 = vmatpush1.bf16.xpose.msra.mxu0 %v266
    %364 = vmatprep.subr.bf16.mxu0 %v269
    %365 = vmatpush1.bf16.xpose.msra.mxu0 %v268
    %366 = vmatprep.subr.bf16.mxu0 %v271
    %367 = vmatpush1.bf16.xpose.msra.mxu0 %v270
    %368 = vmatprep.subr.bf16.mxu0 %v273
    %369 = vmatpush1.bf16.xpose.msra.mxu0 %v272
    %370 = vmatprep.subr.bf16.mxu0 %v275
    %371 = vmatpush1.bf16.xpose.msra.mxu0 %v274
    %372 = vmatprep.subr.bf16.mxu0 %v277
    %373 = vmatpush1.bf16.xpose.msra.mxu0 %v276
    %374 = vmatprep.subr.bf16.mxu0 %v279
    %375 = vmatpush1.bf16.xpose.msra.mxu0 %v278
    %376 = vmatprep.subr.bf16.mxu0 %v281
    %377 = vmatpush1.bf16.xpose.msra.mxu0 %v280
    %378 = vmatprep.mubr.bf16.mxu0 %v103
    %379 = vmatmul.mubr.bf16.gmra.mrb[0].mxu0 %v102
    %v380 = vpop.f32.mrb[0].mxu0
    %v381 = vadd.f32 %v84, %v380
    %v382 = vpop.f32.mrb[0].mxu0
    %v383 = vadd.f32 %v88, %v382
    %v384 = vpop.f32.mrb[0].mxu0
    %v385 = vadd.f32 %v84, %v384
    %v386 = vpop.f32.mrb[0].mxu0
    %v387 = vadd.f32 %v88, %v386
    %388 = vdwg.mxu0
    %389 = vmatprep.subr.bf16.mxu0 %v283
    %390 = vmatpush1.bf16.xpose.msra.mxu0 %v282
    %391 = vmatprep.subr.bf16.mxu0 %v285
    %392 = vmatpush1.bf16.xpose.msra.mxu0 %v284
    %393 = vmatprep.subr.bf16.mxu0 %v287
    %394 = vmatpush1.bf16.xpose.msra.mxu0 %v286
    %395 = vmatprep.subr.bf16.mxu0 %v289
    %396 = vmatpush1.bf16.xpose.msra.mxu0 %v288
    %397 = vmatprep.subr.bf16.mxu0 %v291
    %398 = vmatpush1.bf16.xpose.msra.mxu0 %v290
    %399 = vmatprep.subr.bf16.mxu0 %v293
    %400 = vmatpush1.bf16.xpose.msra.mxu0 %v292
    %401 = vmatprep.subr.bf16.mxu0 %v295
    %402 = vmatpush1.bf16.xpose.msra.mxu0 %v294
    %403 = vmatprep.subr.bf16.mxu0 %v297
    %404 = vmatpush1.bf16.xpose.msra.mxu0 %v296
    %405 = vmatprep.subr.bf16.mxu0 0
    %406 = vmatpush1.bf16.xpose.msra.mxu0 0
    %407 = vmatprep.subr.bf16.mxu0 0
    %408 = vmatpush1.bf16.xpose.msra.mxu0 0
    %409 = vmatprep.subr.bf16.mxu0 0
    %410 = vmatpush1.bf16.xpose.msra.mxu0 0
    %411 = vmatprep.subr.bf16.mxu0 0
    %412 = vmatpush1.bf16.xpose.msra.mxu0 0
    %413 = vmatprep.subr.bf16.mxu0 0
    %414 = vmatpush1.bf16.xpose.msra.mxu0 0
    %415 = vmatprep.subr.bf16.mxu0 0
    %416 = vmatpush1.bf16.xpose.msra.mxu0 0
    %417 = vmatprep.subr.bf16.mxu0 0
    %418 = vmatpush1.bf16.xpose.msra.mxu0 0
    %419 = vmatprep.subr.bf16.mxu0 0
    %420 = vmatpush1.bf16.xpose.msra.mxu0 0
    %421 = vmatprep.mubr.bf16.mxu0 %v103
    %422 = vmatmul.mubr.bf16.gmra.mrb[0].mxu0 %v102
    %v423 = vpop.f32.mrb[0].mxu0
    %v424 = vadd.f32 %v92, %v423
    %v425 = vpop.f32.mrb[0].mxu0
    %v426 = vpop.f32.mrb[0].mxu0
    %v427 = vadd.f32 %v92, %v426
    %v428 = vpop.f32.mrb[0].mxu0
    %429 = vdwg.mxu0
    %430 = vst [vmem:[%s3] sm:$0xff] %v381
    %431 = vst [vmem:[%s3 + $0x8] sm:$0xff] %v383
    %432 = vst [vmem:[%s3 + $0x10] sm:$0xff] %v424
    %433 = vst [vmem:[%s3 + $0x18] sm:$0xff] %v385
    %434 = vst [vmem:[%s3 + $0x20] sm:$0xff] %v387
    %435 = vst [vmem:[%s3 + $0x28] sm:$0xff] %v427
    // Predicated region
    $region18: #{base_lm_head.1} parent=1 // pred_check
      _
    $region19: #{base_lm_head.1} parent=1 // pred_check_branch
      %437 = sbr.rel (0) target = $region21
    $region20: #{base_lm_head.1} parent=1 // pred_region
      _
    $region21: #{base_lm_head.1} parent=1 // pred_fallthru
      _
    // Predicated region
    $region22: #{base_lm_head.1} parent=1 // pred_check
      _
    $region23: #{base_lm_head.1} parent=1 // pred_check_branch
      %439 = sbr.rel (0) target = $region25
    $region24: #{base_lm_head.1} parent=1 // pred_region
      _
    $region25: #{base_lm_head.1} parent=1 // pred_fallthru
      _
    %440 = vsyncpa [#allocation3], 1

</llo_original>
